<compile_context>
chip_gen: v6e
topology: v6e:2x2x1
jax: 0.10.0
libtpu: 0.0.40
codegen_flags: <defaults>
</compile_context>

<pallas_src>
import math

import jax
import jax.numpy as jnp
from jax import lax
from jax.experimental import pallas as pl
from jax.experimental.pallas import tpu as pltpu


def _pick_tile_rows(H, W):
    """Rows per spatial tile: T | H and T*W a multiple of 128 (or the whole frame).

    Prefers the smallest tile with >= 512 lanes (enough pipeline depth per core and
    lane-dense blocks); falls back to the whole frame when divisibility does not
    allow 128-aligned row strips.
    """
    cands = [t for t in range(1, H + 1)
             if H % t == 0 and ((t * W) % 128 == 0 or t == H)]
    good = [t for t in cands if t * W >= 512]
    return min(good) if good else max(cands)


def _build_w_cat(weight_1x5, theta, c_in_padded, out_dtype):
    """(C_out, C_in, 1, 5) torch-layout weight -> (C_out, 5*C_in_p) fused weight.

    Column blocks follow the stacked-RHS order [centre, (-1,-1), (-1,+1), (+1,-1),
    (+1,+1)]; the centre block has -theta*sum(w) folded in, which is algebraically
    identical to `out_normal - theta * out_diff` of the PyTorch module.
    """
    w = weight_1x5[:, :, 0, :].astype(jnp.float32)            # (C_out, C_in, 5)
    c_in = w.shape[1]
    center = w[:, :, 2] - jnp.float32(theta) * jnp.sum(w, axis=-1)
    taps = [center, w[:, :, 0], w[:, :, 1], w[:, :, 3], w[:, :, 4]]
    if c_in_padded != c_in:
        taps = [jnp.pad(t, ((0, 0), (0, c_in_padded - c_in))) for t in taps]
    return jnp.concatenate(taps, axis=1).astype(out_dtype)    # (C_out, 5*C_in_p)


def _diag_cross_kernel(x_ref, top_ref, bot_ref, w_ref, m_ref, o_ref, y_ref, s_ref):
    # x_ref  : (1, C, TILE)     one row strip of one batch element (C = padded C_in)
    # top_ref: (1, 1, C, W)     row just above the strip (zeros at the image edge)
    # bot_ref: (1, 1, C, W)     row just below the strip (zeros at the image edge)
    # w_ref  : (C_out, 5*C)     fused per-tap weights (resident, fetched once)
    # m_ref  : (2, 1, TILE)     column-validity masks for dw=-1 / dw=+1 (resident)
    # o_ref  : (1, C_out, TILE) lane-dense output strip
    # y_ref  : VMEM (C, TILE + 2*W + 2) scratch: [0 | top | strip | bottom | 0]
    # s_ref  : VMEM (5*C, TILE) scratch: stacked RHS of the fused K=5*C matmul
    _, C, TILE = x_ref.shape
    W = top_ref.shape[-1]

    x = x_ref[0]                                              # (C, TILE)
    zcol = jnp.zeros((C, 1), x.dtype)

    # Haloed, flattened row strip.  y[:, 1 + p + (1+dh)*W + dw] is the input value
    # the (dh, dw) tap reads for output position p of this strip; out-of-image rows
    # are zero via the halo arrays, out-of-image columns via the masks below.
    y_ref[:, 0:1] = zcol
    y_ref[:, 1:1 + W] = top_ref[0, 0]
    y_ref[:, 1 + W:1 + W + TILE] = x
    y_ref[:, 1 + W + TILE:1 + 2 * W + TILE] = bot_ref[0, 0]
    y_ref[:, 1 + 2 * W + TILE:] = zcol

    ml = m_ref[0]                                             # (1, TILE), dw = -1 valid
    mr = m_ref[1]                                             # (1, TILE), dw = +1 valid

    # Stacked RHS; row blocks are sublane-aligned because C % 8 == 0.
    s_ref[0 * C:1 * C, :] = x                                           # centre
    s_ref[1 * C:2 * C, :] = y_ref[:, 0:TILE] * ml                       # (-1, -1)
    s_ref[2 * C:3 * C, :] = y_ref[:, 2:2 + TILE] * mr                   # (-1, +1)
    s_ref[3 * C:4 * C, :] = y_ref[:, 2 * W:2 * W + TILE] * ml           # (+1, -1)
    s_ref[4 * C:5 * C, :] = y_ref[:, 2 * W + 2:2 * W + 2 + TILE] * mr   # (+1, +1)

    # Single fused MXU dot: K = 5*C instead of five K = C dots + 4 accumulator adds.
    acc = jnp.dot(w_ref[...], s_ref[...], preferred_element_type=jnp.float32)
    o_ref[0] = acc.astype(o_ref.dtype)


def conv2d_diag_cross(x_nchw, weight_1x5, theta=0.7):
    """Forward pass of Conv2d_Diag_Cross.  NCHW input -> NCHW output."""
    # TODO(synk): only the module's default conv config (stride=1, padding=1,
    # dilation=1, groups=1, bias=False) is implemented.
    N, C_in, H, W = x_nchw.shape
    C_out = weight_1x5.shape[0]
    dtype = x_nchw.dtype
    HW = H * W

    T = _pick_tile_rows(H, W)            # rows per spatial tile
    S = H // T                           # spatial tiles per frame
    TILE = T * W                         # lanes per tile (multiple of 128, or == HW)

    # Pad C_in up to a multiple of 8 so the stacked-RHS row blocks are sublane
    # aligned (zero channels x zero weight columns contribute nothing).
    C = -(-C_in // 8) * 8
    x_use = x_nchw if C == C_in else jnp.pad(
        x_nchw, ((0, 0), (0, C - C_in), (0, 0), (0, 0)))

    w_cat = _build_w_cat(weight_1x5, theta, C, dtype)          # (C_out, 5*C)

    # Column-validity masks (resident; TILE is a multiple of W so one tile's mask
    # pattern works for every tile): dw=-1 needs col >= 1, dw=+1 needs col <= W-2.
    col = jnp.arange(TILE, dtype=jnp.int32) % W
    masks = jnp.stack([col >= 1, col <= W - 2]).astype(dtype).reshape(2, 1, TILE)

    # Per-tile halo rows with zeros already in place at the image border:
    #   top[n, s] = x[n, :, s*T - 1, :]   (zeros for s == 0)
    #   bot[n, s] = x[n, :, (s+1)*T, :]   (zeros for s == S-1)
    zrow = jnp.zeros((N, C, 1, W), dtype)
    top = jnp.concatenate([zrow, x_use[:, :, T - 1:H - 1:T, :]], axis=2)
    bot = jnp.concatenate([x_use[:, :, T:H:T, :], zrow], axis=2)
    top = jnp.transpose(top, (0, 2, 1, 3))                     # (N, S, C, W)
    bot = jnp.transpose(bot, (0, 2, 1, 3))                     # (N, S, C, W)

    x_flat = x_use.reshape(N, C, HW)

    out_flat = pl.pallas_call(
        _diag_cross_kernel,
        out_shape=jax.ShapeDtypeStruct((N, C_out, HW), dtype),
        grid_spec=pltpu.PrefetchScalarGridSpec(
            num_scalar_prefetch=0,
            grid=(N, S),
            in_specs=[
                pl.BlockSpec((1, C, TILE), lambda n, s: (n, 0, s)),
                pl.BlockSpec((1, 1, C, W), lambda n, s: (n, s, 0, 0)),
                pl.BlockSpec((1, 1, C, W), lambda n, s: (n, s, 0, 0)),
                pl.BlockSpec((C_out, 5 * C), lambda n, s: (0, 0)),
                pl.BlockSpec((2, 1, TILE), lambda n, s: (0, 0, 0)),
            ],
            out_specs=pl.BlockSpec((1, C_out, TILE), lambda n, s: (n, 0, s)),
            scratch_shapes=[
                pltpu.VMEM((C, TILE + 2 * W + 2), dtype),
                pltpu.VMEM((5 * C, TILE), dtype),
            ],
        ),
        compiler_params=pltpu.CompilerParams(
            dimension_semantics=("parallel", "parallel"),
            vmem_limit_bytes=32 * 1024 * 1024,
        ),
    )(x_flat, top, bot, w_cat, masks)

    return out_flat.reshape(N, C_out, H, W)                    # free reshape to NCHW


def conv2d_diag_cross_reference(x_nchw, weight_1x5, theta=0.7):
    """Pure-JAX reference mirroring the PyTorch forward (for verification)."""
    C_out, C_in = weight_1x5.shape[0], weight_1x5.shape[1]
    w = weight_1x5[:, :, 0, :]
    z = jnp.zeros((C_out, C_in, 1), w.dtype)
    conv_w = jnp.concatenate(
        [w[:, :, 0:1], z, w[:, :, 1:2], z, w[:, :, 2:3], z,
         w[:, :, 3:4], z, w[:, :, 4:5]], axis=2).reshape(C_out, C_in, 3, 3)
    out_normal = lax.conv_general_dilated(
        x_nchw, conv_w, window_strides=(1, 1), padding=((1, 1), (1, 1)),
        dimension_numbers=("NCHW", "OIHW", "NCHW"),
        precision=lax.Precision.HIGHEST)
    if math.fabs(theta - 0.0) < 1e-8:
        return out_normal
    kdiff = jnp.sum(w, axis=2)[:, :, None, None]
    out_diff = lax.conv_general_dilated(
        x_nchw, kdiff, window_strides=(1, 1), padding="VALID",
        dimension_numbers=("NCHW", "OIHW", "NCHW"),
        precision=lax.Precision.HIGHEST)
    return out_normal - theta * out_diff


def _run_case(key, N, C_in, C_out, H, W, theta):
    kx, kw = jax.random.split(key)
    x = jax.random.normal(kx, (N, C_in, H, W), dtype=jnp.float32)
    # nn.Conv2d(C_in, C_out, kernel_size=(1, 5), bias=False).weight init range.
    bound = 1.0 / math.sqrt(C_in * 1 * 5)
    weight = jax.random.uniform(kw, (C_out, C_in, 1, 5), dtype=jnp.float32,
                                minval=-bound, maxval=bound)

    out = jax.block_until_ready(conv2d_diag_cross(x, weight, theta=theta))
    ref = conv2d_diag_cross_reference(x, weight, theta=theta)
    assert out.shape == (N, C_out, H, W), out.shape
    if not jnp.allclose(out, ref, atol=1e-3, rtol=1e-3):
        err = float(jnp.max(jnp.abs(out - ref)))
        raise AssertionError(
            f"Pallas output mismatch (max abs err {err:.3e}) for "
            f"C_in={C_in}, C_out={C_out}, H={H}, W={W}")


if __name__ == "__main__":
    key = jax.random.PRNGKey(0)
    k1, k2, k3 = jax.random.split(key, 3)
    # Module-typical small config: single 256-lane tile/frame, padded C_in (4 -> 8).
    _run_case(k1, N=2, C_in=4, C_out=8, H=16, W=16, theta=0.7)
    # Taller frame: exercises the spatial grid axis + halo rows (2 tiles of 512 lanes).
    _run_case(k2, N=2, C_in=4, C_out=8, H=64, W=16, theta=0.7)
    # Larger channel count on the same fused-MXU path (no channel padding, 2 tiles).
    _run_case(k3, N=1, C_in=32, C_out=32, H=32, W=32, theta=0.7)
    print("KERNEL_OK")
</pallas_src>

<mosaic_0001>
module attributes {stable_mosaic.version = 11 : i64} {
  func.func @_diag_cross_kernel(%arg0: i32, %arg1: i32, %arg2: memref<1x8x256xf32, #tpu.memory_space<vmem>>, %arg3: memref<1x1x8x16xf32, #tpu.memory_space<vmem>>, %arg4: memref<1x1x8x16xf32, #tpu.memory_space<vmem>>, %arg5: memref<8x40xf32, #tpu.memory_space<vmem>>, %arg6: memref<2x1x256xf32, #tpu.memory_space<vmem>>, %arg7: memref<1x8x256xf32, #tpu.memory_space<vmem>>, %arg8: memref<8x290xf32, #tpu.memory_space<vmem>>, %arg9: memref<40x256xf32, #tpu.memory_space<vmem>>) attributes {dimension_semantics = [#tpu.dimension_semantics<parallel>, #tpu.dimension_semantics<parallel>], iteration_bounds = array<i64: 2, 1>, scalar_prefetch = 0 : i64, scratch_operands = 2 : i64, tpu.core_type = #tpu.core_type<tc>, window_params = [{transform_indices = @transform_0, window_bounds = array<i64: 1, 8, 256>}, {transform_indices = @transform_1, window_bounds = array<i64: 1, 1, 8, 16>}, {transform_indices = @transform_2, window_bounds = array<i64: 1, 1, 8, 16>}, {pipeline_mode = #tpu.pipeline_mode<synchronous>, transform_indices = @transform_3, window_bounds = array<i64: 8, 40>}, {pipeline_mode = #tpu.pipeline_mode<synchronous>, transform_indices = @transform_4, window_bounds = array<i64: 2, 1, 256>}, {transform_indices = @transform_5, window_bounds = array<i64: 1, 8, 256>}]} {
    %c0 = arith.constant 0 : index
    %c0_0 = arith.constant 0 : index
    %c0_1 = arith.constant 0 : index
    %0 = vector.load %arg2[%c0, %c0_0, %c0_1] : memref<1x8x256xf32, #tpu.memory_space<vmem>>, vector<1x8x256xf32>
    %1 = vector.shape_cast %0 : vector<1x8x256xf32> to vector<8x256xf32>
    %cst = arith.constant 0.000000e+00 : f32
    %2 = vector.broadcast %cst : f32 to vector<8x1xf32>
    %c0_2 = arith.constant 0 : index
    %c0_3 = arith.constant 0 : index
    %3 = vector.load %arg8[%c0_2, %c0_3] : memref<8x290xf32, #tpu.memory_space<vmem>>, vector<8x1xf32>
    tpu.vector_store %arg8[%c0_2, %c0_3], %2 {strides = array<i32>} : memref<8x290xf32, #tpu.memory_space<vmem>>, vector<8x1xf32>,
    %c0_4 = arith.constant 0 : index
    %c0_5 = arith.constant 0 : index
    %c0_6 = arith.constant 0 : index
    %c0_7 = arith.constant 0 : index
    %4 = vector.load %arg3[%c0_4, %c0_5, %c0_6, %c0_7] : memref<1x1x8x16xf32, #tpu.memory_space<vmem>>, vector<1x1x8x16xf32>
    %5 = vector.shape_cast %4 : vector<1x1x8x16xf32> to vector<8x16xf32>
    %c0_8 = arith.constant 0 : index
    %c1 = arith.constant 1 : index
    %6 = vector.load %arg8[%c0_8, %c1] : memref<8x290xf32, #tpu.memory_space<vmem>>, vector<8x16xf32>
    tpu.vector_store %arg8[%c0_8, %c1], %5 {strides = array<i32>} : memref<8x290xf32, #tpu.memory_space<vmem>>, vector<8x16xf32>,
    %c0_9 = arith.constant 0 : index
    %c17 = arith.constant 17 : index
    %7 = vector.load %arg8[%c0_9, %c17] : memref<8x290xf32, #tpu.memory_space<vmem>>, vector<8x256xf32>
    tpu.vector_store %arg8[%c0_9, %c17], %1 {strides = array<i32>} : memref<8x290xf32, #tpu.memory_space<vmem>>, vector<8x256xf32>,
    %c0_10 = arith.constant 0 : index
    %c0_11 = arith.constant 0 : index
    %c0_12 = arith.constant 0 : index
    %c0_13 = arith.constant 0 : index
    %8 = vector.load %arg4[%c0_10, %c0_11, %c0_12, %c0_13] : memref<1x1x8x16xf32, #tpu.memory_space<vmem>>, vector<1x1x8x16xf32>
    %9 = vector.shape_cast %8 : vector<1x1x8x16xf32> to vector<8x16xf32>
    %c0_14 = arith.constant 0 : index
    %c273 = arith.constant 273 : index
    %10 = vector.load %arg8[%c0_14, %c273] : memref<8x290xf32, #tpu.memory_space<vmem>>, vector<8x16xf32>
    tpu.vector_store %arg8[%c0_14, %c273], %9 {strides = array<i32>} : memref<8x290xf32, #tpu.memory_space<vmem>>, vector<8x16xf32>,
    %c0_15 = arith.constant 0 : index
    %c289 = arith.constant 289 : index
    %11 = vector.load %arg8[%c0_15, %c289] : memref<8x290xf32, #tpu.memory_space<vmem>>, vector<8x1xf32>
    tpu.vector_store %arg8[%c0_15, %c289], %2 {strides = array<i32>} : memref<8x290xf32, #tpu.memory_space<vmem>>, vector<8x1xf32>,
    %c0_16 = arith.constant 0 : index
    %c0_17 = arith.constant 0 : index
    %c0_18 = arith.constant 0 : index
    %12 = vector.load %arg6[%c0_16, %c0_17, %c0_18] : memref<2x1x256xf32, #tpu.memory_space<vmem>>, vector<1x1x256xf32>
    %13 = vector.shape_cast %12 : vector<1x1x256xf32> to vector<1x256xf32>
    %c1_19 = arith.constant 1 : index
    %c0_20 = arith.constant 0 : index
    %c0_21 = arith.constant 0 : index
    %14 = vector.load %arg6[%c1_19, %c0_20, %c0_21] : memref<2x1x256xf32, #tpu.memory_space<vmem>>, vector<1x1x256xf32>
    %15 = vector.shape_cast %14 : vector<1x1x256xf32> to vector<1x256xf32>
    %c0_22 = arith.constant 0 : index
    %c0_23 = arith.constant 0 : index
    %16 = vector.load %arg9[%c0_22, %c0_23] : memref<40x256xf32, #tpu.memory_space<vmem>>, vector<8x256xf32>
    tpu.vector_store %arg9[%c0_22, %c0_23], %1 {strides = array<i32>} : memref<40x256xf32, #tpu.memory_space<vmem>>, vector<8x256xf32>,
    %c0_24 = arith.constant 0 : index
    %c0_25 = arith.constant 0 : index
    %17 = vector.load %arg8[%c0_24, %c0_25] : memref<8x290xf32, #tpu.memory_space<vmem>>, vector<8x256xf32>
    %18 = vector.broadcast %13 : vector<1x256xf32> to vector<8x256xf32>
    %19 = arith.mulf %17, %18 : vector<8x256xf32>
    %c8 = arith.constant 8 : index
    %c0_26 = arith.constant 0 : index
    %20 = vector.load %arg9[%c8, %c0_26] : memref<40x256xf32, #tpu.memory_space<vmem>>, vector<8x256xf32>
    tpu.vector_store %arg9[%c8, %c0_26], %19 {strides = array<i32>} : memref<40x256xf32, #tpu.memory_space<vmem>>, vector<8x256xf32>,
    %c0_27 = arith.constant 0 : index
    %c2 = arith.constant 2 : index
    %21 = vector.load %arg8[%c0_27, %c2] : memref<8x290xf32, #tpu.memory_space<vmem>>, vector<8x256xf32>
    %22 = vector.broadcast %15 : vector<1x256xf32> to vector<8x256xf32>
    %23 = arith.mulf %21, %22 : vector<8x256xf32>
    %c16 = arith.constant 16 : index
    %c0_28 = arith.constant 0 : index
    %24 = vector.load %arg9[%c16, %c0_28] : memref<40x256xf32, #tpu.memory_space<vmem>>, vector<8x256xf32>
    tpu.vector_store %arg9[%c16, %c0_28], %23 {strides = array<i32>} : memref<40x256xf32, #tpu.memory_space<vmem>>, vector<8x256xf32>,
    %c0_29 = arith.constant 0 : index
    %c32 = arith.constant 32 : index
    %25 = vector.load %arg8[%c0_29, %c32] : memref<8x290xf32, #tpu.memory_space<vmem>>, vector<8x256xf32>
    %26 = vector.broadcast %13 : vector<1x256xf32> to vector<8x256xf32>
    %27 = arith.mulf %25, %26 : vector<8x256xf32>
    %c24 = arith.constant 24 : index
    %c0_30 = arith.constant 0 : index
    %28 = vector.load %arg9[%c24, %c0_30] : memref<40x256xf32, #tpu.memory_space<vmem>>, vector<8x256xf32>
    tpu.vector_store %arg9[%c24, %c0_30], %27 {strides = array<i32>} : memref<40x256xf32, #tpu.memory_space<vmem>>, vector<8x256xf32>,
    %c0_31 = arith.constant 0 : index
    %c34 = arith.constant 34 : index
    %29 = vector.load %arg8[%c0_31, %c34] : memref<8x290xf32, #tpu.memory_space<vmem>>, vector<8x256xf32>
    %30 = vector.broadcast %15 : vector<1x256xf32> to vector<8x256xf32>
    %31 = arith.mulf %29, %30 : vector<8x256xf32>
    %c32_32 = arith.constant 32 : index
    %c0_33 = arith.constant 0 : index
    %32 = vector.load %arg9[%c32_32, %c0_33] : memref<40x256xf32, #tpu.memory_space<vmem>>, vector<8x256xf32>
    tpu.vector_store %arg9[%c32_32, %c0_33], %31 {strides = array<i32>} : memref<40x256xf32, #tpu.memory_space<vmem>>, vector<8x256xf32>,
    %c0_34 = arith.constant 0 : index
    %c0_35 = arith.constant 0 : index
    %33 = vector.load %arg5[%c0_34, %c0_35] : memref<8x40xf32, #tpu.memory_space<vmem>>, vector<8x40xf32>
    %c0_36 = arith.constant 0 : index
    %c0_37 = arith.constant 0 : index
    %34 = vector.load %arg9[%c0_36, %c0_37] : memref<40x256xf32, #tpu.memory_space<vmem>>, vector<40x256xf32>
    %cst_38 = arith.constant dense<0.000000e+00> : vector<8x256xf32>
    %35 = tpu.matmul %33, %34, %cst_38 {dimension_numbers = #tpu.dot_dimension_numbers<[1], [0], [0], [1], [0, 0, 1, 1], [], []>} : vector<8x40xf32>, vector<40x256xf32>, vector<8x256xf32> -> vector<8x256xf32>
    %c0_39 = arith.constant 0 : index
    %c0_40 = arith.constant 0 : index
    %c0_41 = arith.constant 0 : index
    %36 = vector.load %arg7[%c0_39, %c0_40, %c0_41] : memref<1x8x256xf32, #tpu.memory_space<vmem>>, vector<1x8x256xf32>
    %37 = vector.shape_cast %36 : vector<1x8x256xf32> to vector<8x256xf32>
    %38 = vector.shape_cast %35 : vector<8x256xf32> to vector<1x8x256xf32>
    tpu.vector_store %arg7[%c0_39, %c0_40, %c0_41], %38 {strides = array<i32>} : memref<1x8x256xf32, #tpu.memory_space<vmem>>, vector<1x8x256xf32>,
    return
  }
  func.func @transform_0(%arg0: i32, %arg1: i32) -> (i32, i32, i32) {
    %c0_i32 = arith.constant 0 : i32
    %c0_i32_0 = arith.constant 0 : i32
    return %arg0, %c0_i32, %arg1 : i32, i32, i32
  }
  func.func @transform_1(%arg0: i32, %arg1: i32) -> (i32, i32, i32, i32) {
    %c0_i32 = arith.constant 0 : i32
    %c0_i32_0 = arith.constant 0 : i32
    %c0_i32_1 = arith.constant 0 : i32
    return %arg0, %arg1, %c0_i32, %c0_i32_0 : i32, i32, i32, i32
  }
  func.func @transform_2(%arg0: i32, %arg1: i32) -> (i32, i32, i32, i32) {
    %c0_i32 = arith.constant 0 : i32
    %c0_i32_0 = arith.constant 0 : i32
    %c0_i32_1 = arith.constant 0 : i32
    return %arg0, %arg1, %c0_i32, %c0_i32_0 : i32, i32, i32, i32
  }
  func.func @transform_3(%arg0: i32, %arg1: i32) -> (i32, i32) {
    %c0_i32 = arith.constant 0 : i32
    %c0_i32_0 = arith.constant 0 : i32
    %c0_i32_1 = arith.constant 0 : i32
    return %c0_i32, %c0_i32_0 : i32, i32
  }
  func.func @transform_4(%arg0: i32, %arg1: i32) -> (i32, i32, i32) {
    %c0_i32 = arith.constant 0 : i32
    %c0_i32_0 = arith.constant 0 : i32
    %c0_i32_1 = arith.constant 0 : i32
    %c0_i32_2 = arith.constant 0 : i32
    return %c0_i32, %c0_i32_0, %c0_i32_1 : i32, i32, i32
  }
  func.func @transform_5(%arg0: i32, %arg1: i32) -> (i32, i32, i32) {
    %c0_i32 = arith.constant 0 : i32
    %c0_i32_0 = arith.constant 0 : i32
    return %arg0, %c0_i32, %arg1 : i32, i32, i32
  }
}

</mosaic_0001>

<llo_original>
// kernel: tpu_custom_call.1
$region0: #{tpu_custom_call.1}
  #allocation0 [shape = 'u32[]', space=smem, size = 0x4, offset = 0x4, fixed_abs, tag = 'smem constant byte address 0x4 - core index']
  #allocation1 [shape = 'u32[144,128]{1,0:T(1,128)}', space=vmem, size = 0x12000, scoped, tag = 'internal scratch']
  #allocation2 [shape = 'f32[8,290]{1,0:T(8,128)}', space=vmem, size = 0x3000, scoped, tag = 'scratch operand']
  #allocation3 [shape = 'f32[40,256]{1,0:T(8,128)}', space=vmem, size = 0xa000, scoped, tag = 'scratch operand']
  %s0 = inlined_call_operand.hbm [shape: f32[2,8,256], index: 0, kind: input, shape index: {}]
  %s1 = inlined_call_operand.hbm [shape: f32[2,1,8,16], index: 1, kind: input, shape index: {}]
  %s2 = inlined_call_operand.hbm [shape: f32[2,1,8,16], index: 2, kind: input, shape index: {}]
  %s3 = inlined_call_operand.hbm [shape: f32[8,40], index: 3, kind: input, shape index: {}]
  %s4 = inlined_call_operand.vmem [shape: f32[2,1,256], index: 4, kind: input, shape index: {}]
  %s5 = inlined_call_operand.hbm [shape: f32[2,8,256], index: 5, kind: output, shape index: {}]
  %s6 = sld [smem:[#allocation0]]
  $region69: #{tpu_custom_call.1} parent=0
    _
  %s8 = ssub.s32 1, %s6
  %s9 = scalar_select 0, %s8, %s6
  $region1: #{tpu_custom_call.1} parent=0
    #allocation4 [shape = 'u8[16384]{0}', space=vmem, size = 0x4000, scoped, tag = 'input window, operand 0']
    #allocation5 [shape = 's32[2]{0}', space=sflag, size = 0x8, scoped, tag = 'scoped memory for tpu_custom_call.1']
    #allocation6 [shape = 's32[2]{0}', space=sflag, size = 0x8, scoped, tag = 'scoped memory for tpu_custom_call.1']
    #allocation7 [shape = 'u8[8192]{0}', space=vmem, size = 0x2000, scoped, tag = 'input window, operand 1']
    #allocation8 [shape = 's32[2]{0}', space=sflag, size = 0x8, scoped, tag = 'scoped memory for tpu_custom_call.1']
    #allocation9 [shape = 'u8[8192]{0}', space=vmem, size = 0x2000, scoped, tag = 'input window, operand 2']
    #allocation10 [shape = 'u8[4096]{0}', space=vmem, size = 0x1000, scoped, tag = 'input window, operand 3, single buffered']
    #allocation11 [shape = 's32[1]{0}', space=sflag, size = 0x4, scoped, tag = 'scoped memory for tpu_custom_call.1']
    #allocation12 [shape = 'u8[16384]{0}', space=vmem, size = 0x4000, scoped, tag = 'output window, operand 0']
    %10 = vsyncpa [#allocation5], 0
    %s11 = scalar_lea.sflag [#allocation5], 1
    %12 = vsyncpa %s11, 0
    %13 = vsyncpa [#allocation8], 0
    %s14 = scalar_lea.sflag [#allocation8], 1
    %15 = vsyncpa %s14, 0
    %16 = vsyncpa [#allocation11], 0
    %17 = vsyncpa [#allocation6], 0
    %s18 = scalar_lea.sflag [#allocation6], 1
    %19 = vsyncpa %s18, 0
    loop: start=0, step=1, limit=4
    $region2: #{tpu_custom_call.1} parent=1 // loop_pre_header
      _
    $region3: #{tpu_custom_call.1} parent=1 // loop_header
      %s21 = sphi 0, %s25
      %p22 = scmp.ge.s32.totalorder %s21, 4
      %s28 = sphi 0, %s40
      %s29 = sphi 0, %s36
      %s30 = sphi 0, %s28
      %s31 = sphi 0, %s29
      %s32 = sphi 0, %s30
      %s33 = sphi 0, %s31
      %s45 = sphi 0, %s47
      %s48 = sphi 0, %s45
      %s49 = sphi 0, %s48
      %s65 = sphi 0, %s49
      %s73 = sphi 0, %s75
      %s76 = sphi 0, %s73
      %s77 = sphi 0, %s76
      %s93 = sphi 0, %s77
      %s101 = sphi 0, %s103
      %s104 = sphi 0, %s101
      %s105 = sphi 0, %s104
      %s121 = sphi 0, %s105
      %s125 = sphi 0, %s125
      %s127 = sphi 0, %s125
      %s128 = sphi 0, %s127
      %s142 = sphi 0, %s128
      %s146 = sphi 0, %s146
      %s148 = sphi 0, %s146
      %s149 = sphi 0, %s148
      %s163 = sphi 0, %s149
      %s171 = sphi 0, %s173
      %s174 = sphi 0, %s171
      %s175 = sphi 0, %s174
      %s191 = sphi 0, %s175
    $region4: #{tpu_custom_call.1} parent=1 // loop_header_branch
      %24 = sbr.rel (%p22) target = $region8
    $region5: #{tpu_custom_call.1} parent=1 // loop_body
      %s26 = ssub.s32 %s21, 1
      %s27 = ssub.s32 %s21, 2
      %s34 = sadd.s32 1, %s29
      %p35 = scmp.ge.s32.totalorder %s34, 1
      %s36 = scalar_select %p35, 0, %s34
      %s37 = sadd.s32 1, %s28
      %s38 = scalar_select %p35, %s37, %s28
      %p39 = scmp.ge.s32.totalorder %s38, 2
      %s40 = scalar_select %p39, 0, %s38
      %s41 = ssub.s32 %s28, %s40
      %s42 = ssub.s32 %s29, %s36
      %s43 = sor.u32 %s41, %s42
      %p44 = scmp.eq.s32.totalorder %s43, 0
      %s46 = sadd.s32 %s45, 1
      %s47 = scalar_select %p44, %s45, %s46
      %p50 = pneg %p44
      %p51 = scmp.eq.s32.totalorder %s21, 1
      %p52 = por %p50, %p51
      %p53 = scmp.ne.s32.totalorder %s45, %s48
      %p54 = scmp.eq.s32.totalorder %s21, 0
      %p55 = por %p53, %p54
      %p56 = scmp.ne.s32.totalorder %s45, %s48
      %p57 = scmp.eq.s32.totalorder %s26, 1
      %p58 = por %p56, %p57
      %p59 = scmp.ne.s32.totalorder %s48, %s49
      %p60 = scmp.eq.s32.totalorder %s26, 0
      %p61 = por %p59, %p60
      %p62 = scmp.ne.s32.totalorder %s48, %s49
      %p63 = scmp.eq.s32.totalorder %s27, 1
      %p64 = por %p62, %p63
      %p66 = scmp.ne.s32.totalorder %s49, %s65
      %p67 = scmp.eq.s32.totalorder %s27, 0
      %p68 = por %p66, %p67
      %s69 = ssub.s32 %s28, %s40
      %s70 = ssub.s32 %s29, %s36
      %s71 = sor.u32 %s69, %s70
      %p72 = scmp.eq.s32.totalorder %s71, 0
      %s74 = sadd.s32 %s73, 1
      %s75 = scalar_select %p72, %s73, %s74
      %p78 = pneg %p72
      %p79 = scmp.eq.s32.totalorder %s21, 1
      %p80 = por %p78, %p79
      %p81 = scmp.ne.s32.totalorder %s73, %s76
      %p82 = scmp.eq.s32.totalorder %s21, 0
      %p83 = por %p81, %p82
      %p84 = scmp.ne.s32.totalorder %s73, %s76
      %p85 = scmp.eq.s32.totalorder %s26, 1
      %p86 = por %p84, %p85
      %p87 = scmp.ne.s32.totalorder %s76, %s77
      %p88 = scmp.eq.s32.totalorder %s26, 0
      %p89 = por %p87, %p88
      %p90 = scmp.ne.s32.totalorder %s76, %s77
      %p91 = scmp.eq.s32.totalorder %s27, 1
      %p92 = por %p90, %p91
      %p94 = scmp.ne.s32.totalorder %s77, %s93
      %p95 = scmp.eq.s32.totalorder %s27, 0
      %p96 = por %p94, %p95
      %s97 = ssub.s32 %s28, %s40
      %s98 = ssub.s32 %s29, %s36
      %s99 = sor.u32 %s97, %s98
      %p100 = scmp.eq.s32.totalorder %s99, 0
      %s102 = sadd.s32 %s101, 1
      %s103 = scalar_select %p100, %s101, %s102
      %p106 = pneg %p100
      %p107 = scmp.eq.s32.totalorder %s21, 1
      %p108 = por %p106, %p107
      %p109 = scmp.ne.s32.totalorder %s101, %s104
      %p110 = scmp.eq.s32.totalorder %s21, 0
      %p111 = por %p109, %p110
      %p112 = scmp.ne.s32.totalorder %s101, %s104
      %p113 = scmp.eq.s32.totalorder %s26, 1
      %p114 = por %p112, %p113
      %p115 = scmp.ne.s32.totalorder %s104, %s105
      %p116 = scmp.eq.s32.totalorder %s26, 0
      %p117 = por %p115, %p116
      %p118 = scmp.ne.s32.totalorder %s104, %s105
      %p119 = scmp.eq.s32.totalorder %s27, 1
      %p120 = por %p118, %p119
      %p122 = scmp.ne.s32.totalorder %s105, %s121
      %p123 = scmp.eq.s32.totalorder %s27, 0
      %p124 = por %p122, %p123
      %s126 = sadd.s32 %s125, 1
      %p129 = scmp.eq.s32.totalorder %s21, 1
      %p130 = scmp.ne.s32.totalorder %s125, %s127
      %p131 = scmp.eq.s32.totalorder %s21, 0
      %p132 = por %p130, %p131
      %p133 = scmp.ne.s32.totalorder %s125, %s127
      %p134 = scmp.eq.s32.totalorder %s26, 1
      %p135 = por %p133, %p134
      %p136 = scmp.ne.s32.totalorder %s127, %s128
      %p137 = scmp.eq.s32.totalorder %s26, 0
      %p138 = por %p136, %p137
      %p139 = scmp.ne.s32.totalorder %s127, %s128
      %p140 = scmp.eq.s32.totalorder %s27, 1
      %p141 = por %p139, %p140
      %p143 = scmp.ne.s32.totalorder %s128, %s142
      %p144 = scmp.eq.s32.totalorder %s27, 0
      %p145 = por %p143, %p144
      %s147 = sadd.s32 %s146, 1
      %p150 = scmp.eq.s32.totalorder %s21, 1
      %p151 = scmp.ne.s32.totalorder %s146, %s148
      %p152 = scmp.eq.s32.totalorder %s21, 0
      %p153 = por %p151, %p152
      %p154 = scmp.ne.s32.totalorder %s146, %s148
      %p155 = scmp.eq.s32.totalorder %s26, 1
      %p156 = por %p154, %p155
      %p157 = scmp.ne.s32.totalorder %s148, %s149
      %p158 = scmp.eq.s32.totalorder %s26, 0
      %p159 = por %p157, %p158
      %p160 = scmp.ne.s32.totalorder %s148, %s149
      %p161 = scmp.eq.s32.totalorder %s27, 1
      %p162 = por %p160, %p161
      %p164 = scmp.ne.s32.totalorder %s149, %s163
      %p165 = scmp.eq.s32.totalorder %s27, 0
      %p166 = por %p164, %p165
      %s167 = ssub.s32 %s28, %s40
      %s168 = ssub.s32 %s29, %s36
      %s169 = sor.u32 %s167, %s168
      %p170 = scmp.eq.s32.totalorder %s169, 0
      %s172 = sadd.s32 %s171, 1
      %s173 = scalar_select %p170, %s171, %s172
      %p176 = pneg %p170
      %p177 = scmp.eq.s32.totalorder %s21, 1
      %p178 = por %p176, %p177
      %p179 = scmp.ne.s32.totalorder %s171, %s174
      %p180 = scmp.eq.s32.totalorder %s21, 0
      %p181 = por %p179, %p180
      %p182 = scmp.ne.s32.totalorder %s171, %s174
      %p183 = scmp.eq.s32.totalorder %s26, 1
      %p184 = por %p182, %p183
      %p185 = scmp.ne.s32.totalorder %s174, %s175
      %p186 = scmp.eq.s32.totalorder %s26, 0
      %p187 = por %p185, %p186
      %p188 = scmp.ne.s32.totalorder %s174, %s175
      %p189 = scmp.eq.s32.totalorder %s27, 1
      %p190 = por %p188, %p189
      %p192 = scmp.ne.s32.totalorder %s175, %s191
      %p193 = scmp.eq.s32.totalorder %s27, 0
      %p194 = por %p192, %p193
      %p195 = scmp.le.s32.totalorder 1, %s21
      %p196 = scmp.lt.s32.totalorder %s21, 3
      %p197 = pnand %p195, %p196
      %p198 = pneg %p197
      // Predicated region
      $region9: #{tpu_custom_call.1} parent=5 // pred_check
        _
      $region10: #{tpu_custom_call.1} parent=5 // pred_check_branch
        %200 = sbr.rel (%p197) target = $region12
      $region11: #{tpu_custom_call.1} parent=5 // pred_region
        %s201 = ssub.s32 %s21, 1
        // Predicated region
        $region13: #{tpu_custom_call.1} parent=11 // pred_check
          %p202 = pneg %p138
        $region14: #{tpu_custom_call.1} parent=11 // pred_check_branch
          %204 = sbr.rel (%p202) target = $region16
        $region15: #{tpu_custom_call.1} parent=11 // pred_region
          %s206 = ssub.s32 128, 128
          %207 = vsyncadd [#allocation11], %s206
          %s209 = sshll.u32 [#allocation10], 4
          %s210 = int_to_ptr.vmem [resolvable:$true] %s209
          %212 = dma.hbm_to_vmem [thread:$0]  %s3, 128, %s210, [#allocation11]
        $region16: #{tpu_custom_call.1} parent=11 // pred_fallthru
          _
        // Predicated region
        $region17: #{tpu_custom_call.1} parent=11 // pred_check
          %p213 = pneg %p159
        $region18: #{tpu_custom_call.1} parent=11 // pred_check_branch
          %215 = sbr.rel (%p213) target = $region20
        $region19: #{tpu_custom_call.1} parent=11 // pred_region
          _
        $region20: #{tpu_custom_call.1} parent=11 // pred_fallthru
          _
      $region12: #{tpu_custom_call.1} parent=5 // pred_fallthru
        _
      %p216 = scmp.lt.s32.totalorder %s21, 2
      // Predicated region
      $region21: #{tpu_custom_call.1} parent=5 // pred_check
        %p217 = pneg %p216
      $region22: #{tpu_custom_call.1} parent=5 // pred_check_branch
        %219 = sbr.rel (%p217) target = $region24
      $region23: #{tpu_custom_call.1} parent=5 // pred_region
        // Predicated region
        $region25: #{tpu_custom_call.1} parent=23 // pred_check
          %p220 = pneg %p55
        $region26: #{tpu_custom_call.1} parent=23 // pred_check_branch
          %222 = sbr.rel (%p220) target = $region28
        $region27: #{tpu_custom_call.1} parent=23 // pred_region
          %s223 = sand.u32 %s45, 1
          %s224 = scalar_lea.sflag [#allocation5], %s223
          %s225 = sand.u32 %s45, 1
          %s226 = smul.addr %s225, 16
          %s227 = scalar_lea.vmem [#allocation4], %s226
          %s228 = smul.u32 2, %s29
          %s230 = ssub.s32 256, 256
          %231 = vsyncadd %s224, %s230
          %s232 = smul.addr %s28, 2
          %s233 = sadd.s32 %s228, %s232
          %s234 = smul.addr %s233, 128
          %s235 = scalar_lea.hbm %s0, %s234
          %s237 = sshll.u32 %s227, 4
          %s238 = int_to_ptr.vmem [resolvable:$true] %s237
          %240 = dma.hbm_to_vmem [thread:$0]  %s235, 256, %s238, %s224
        $region28: #{tpu_custom_call.1} parent=23 // pred_fallthru
          _
        // Predicated region
        $region29: #{tpu_custom_call.1} parent=23 // pred_check
          %p241 = pneg %p83
        $region30: #{tpu_custom_call.1} parent=23 // pred_check_branch
          %243 = sbr.rel (%p241) target = $region32
        $region31: #{tpu_custom_call.1} parent=23 // pred_region
          %s244 = sand.u32 %s21, 1
          %s245 = scalar_lea.sflag [#allocation8], %s244
          %s246 = sand.u32 %s73, 1
          %s247 = smul.addr %s246, 8
          %s248 = scalar_lea.vmem [#allocation7], %s247
          %s250 = ssub.s32 128, 128
          %251 = vsyncadd %s245, %s250
          %s252 = sadd.s32 %s29, %s28
          %s253 = smul.addr %s252, 128
          %s254 = scalar_lea.hbm %s1, %s253
          %s256 = sshll.u32 %s248, 4
          %s257 = int_to_ptr.vmem [resolvable:$true] %s256
          %259 = dma.hbm_to_vmem [thread:$0]  %s254, 128, %s257, %s245
        $region32: #{tpu_custom_call.1} parent=23 // pred_fallthru
          _
        // Predicated region
        $region33: #{tpu_custom_call.1} parent=23 // pred_check
          %p260 = pneg %p111
        $region34: #{tpu_custom_call.1} parent=23 // pred_check_branch
          %262 = sbr.rel (%p260) target = $region36
        $region35: #{tpu_custom_call.1} parent=23 // pred_region
          %s263 = sand.u32 %s21, 1
          %s264 = scalar_lea.sflag [#allocation8], %s263
          %s265 = sand.u32 %s101, 1
          %s266 = smul.addr %s265, 8
          %s267 = scalar_lea.vmem [#allocation9], %s266
          %s269 = ssub.s32 128, 128
          %270 = vsyncadd %s264, %s269
          %s271 = sadd.s32 %s29, %s28
          %s272 = smul.addr %s271, 128
          %s273 = scalar_lea.hbm %s2, %s272
          %s275 = sshll.u32 %s267, 4
          %s276 = int_to_ptr.vmem [resolvable:$true] %s275
          %278 = dma.hbm_to_vmem [thread:$0]  %s273, 128, %s276, %s264
        $region36: #{tpu_custom_call.1} parent=23 // pred_fallthru
          _
      $region24: #{tpu_custom_call.1} parent=5 // pred_fallthru
        _
      %p279 = scmp.le.s32.totalorder 1, %s21
      %p280 = scmp.lt.s32.totalorder %s21, 3
      %p281 = pnand %p279, %p280
      %p282 = pneg %p281
      // Predicated region
      $region37: #{tpu_custom_call.1} parent=5 // pred_check
        _
      $region38: #{tpu_custom_call.1} parent=5 // pred_check_branch
        %284 = sbr.rel (%p281) target = $region40
      $region39: #{tpu_custom_call.1} parent=5 // pred_region
        %s285 = ssub.s32 %s21, 1
        %s286 = sand.u32 %s48, 1
        %s287 = scalar_lea.sflag [#allocation5], %s286
        %s288 = sand.u32 %s48, 1
        %s289 = smul.addr %s288, 16
        %s290 = scalar_lea.vmem [#allocation4], %s289
        // Predicated region
        $region41: #{tpu_custom_call.1} parent=39 // pred_check
          %p291 = pneg %p61
        $region42: #{tpu_custom_call.1} parent=39 // pred_check_branch
          %293 = sbr.rel (%p291) target = $region44
        $region43: #{tpu_custom_call.1} parent=39 // pred_region
          %294 = dma.done %s287, 256
        $region44: #{tpu_custom_call.1} parent=39 // pred_fallthru
          _
        %s295 = sand.u32 %s26, 1
        %s296 = scalar_lea.sflag [#allocation8], %s295
        %s297 = sand.u32 %s76, 1
        %s298 = smul.addr %s297, 8
        %s299 = scalar_lea.vmem [#allocation7], %s298
        // Predicated region
        $region45: #{tpu_custom_call.1} parent=39 // pred_check
          %p300 = pneg %p89
        $region46: #{tpu_custom_call.1} parent=39 // pred_check_branch
          %302 = sbr.rel (%p300) target = $region48
        $region47: #{tpu_custom_call.1} parent=39 // pred_region
          %303 = dma.done %s296, 128
        $region48: #{tpu_custom_call.1} parent=39 // pred_fallthru
          _
        %s304 = sand.u32 %s26, 1
        %s305 = scalar_lea.sflag [#allocation8], %s304
        %s306 = sand.u32 %s104, 1
        %s307 = smul.addr %s306, 8
        %s308 = scalar_lea.vmem [#allocation9], %s307
        // Predicated region
        $region49: #{tpu_custom_call.1} parent=39 // pred_check
          %p309 = pneg %p117
        $region50: #{tpu_custom_call.1} parent=39 // pred_check_branch
          %311 = sbr.rel (%p309) target = $region52
        $region51: #{tpu_custom_call.1} parent=39 // pred_region
          %312 = dma.done %s305, 128
        $region52: #{tpu_custom_call.1} parent=39 // pred_fallthru
          _
        // Predicated region
        $region53: #{tpu_custom_call.1} parent=39 // pred_check
          %p313 = pneg %p138
        $region54: #{tpu_custom_call.1} parent=39 // pred_check_branch
          %315 = sbr.rel (%p313) target = $region56
        $region55: #{tpu_custom_call.1} parent=39 // pred_region
          %316 = dma.done [#allocation11], 128
        $region56: #{tpu_custom_call.1} parent=39 // pred_fallthru
          _
        %s317 = sand.u32 %s48, 1
        %s318 = scalar_lea.sflag [#allocation5], %s317
        %s319 = sand.u32 %s48, 1
        %s320 = smul.addr %s319, 16
        %s321 = scalar_lea.vmem [#allocation4], %s320
        %p322 = pneg %p61
        %p323 = pneg %p58
        %s324 = sand.u32 %s26, 1
        %s325 = scalar_lea.sflag [#allocation8], %s324
        %s326 = sand.u32 %s76, 1
        %s327 = smul.addr %s326, 8
        %s328 = scalar_lea.vmem [#allocation7], %s327
        %p329 = pneg %p89
        %p330 = pneg %p86
        %s331 = sand.u32 %s26, 1
        %s332 = scalar_lea.sflag [#allocation8], %s331
        %s333 = sand.u32 %s104, 1
        %s334 = smul.addr %s333, 8
        %s335 = scalar_lea.vmem [#allocation9], %s334
        %p336 = pneg %p117
        %p337 = pneg %p114
        %p338 = pneg %p138
        %p339 = pneg %p135
        %p340 = pneg %p159
        %p341 = pneg %p156
        %p342 = pneg %p187
        %p343 = pneg %p184
        %s344 = sand.u32 %s174, 1
        %s345 = scalar_lea.sflag [#allocation6], %s344
        %s346 = sand.u32 %s174, 1
        %s347 = smul.addr %s346, 16
        %s348 = scalar_lea.vmem [#allocation12], %s347
        %s349 = smul.u32 2, %s31
        %s350 = smul.u32 2, %s31
        %v351 = vld [vmem:[%s290] sm:$0xff]
        %v352 = vld [vmem:[%s290 + $0x8] sm:$0xff]
        %vm353 = vcmask 7168
        %354 = vst.msk [vmem:[#allocation2] sm:$0xff] %vm353, 0.0
        %v355 = vld [vmem:[%s299] sm:$0xff]
        %357 = vrot.lane.b32.xlu0 %v355, 1
        %v358 = vpop.permute.xlu0 %357
        %vm360 = vcmask 138248
        %361 = vst.msk [vmem:[#allocation2] sm:$0xff] %vm360, %v358
        %364 = vrot.lane.b32.xlu0 %v351, 17
        %v365 = vpop.permute.xlu0 %364
        %366 = vrot.lane.b32.xlu0 %v352, 17
        %v367 = vpop.permute.xlu0 %366
        %vm368 = vcmask 138240
        %v369 = vsel %vm368, %v365, %v367
        %vm373 = vcmask 1047688
        %374 = vst.msk [vmem:[#allocation2] sm:$0xff] %vm373, %v365
        %375 = vst [vmem:[#allocation2 + $0x8] sm:$0xff] %v369
        %376 = vst.msk [vmem:[#allocation2 + $0x10] sm:$0xff] %vm368, %v367
        %v377 = vld [vmem:[%s308] sm:$0xff]
        %379 = vrot.lane.b32.xlu0 %v377, 17
        %v380 = vpop.permute.xlu0 %379
        %vm382 = vcmask 269448
        %383 = vst.msk [vmem:[#allocation2 + $0x10] sm:$0xff] %vm382, %v380
        %vm384 = vcmask 277768
        %385 = vst.msk [vmem:[#allocation2 + $0x10] sm:$0xff] %vm384, 0.0
        %v386 = vld [vmem:[%s4] sm:$0x3]
        %s387 = scalar_lea.vmem %s4, 2
        %v388 = vld [vmem:[%s387] sm:$0x3]
        %389 = vst [vmem:[#allocation3] sm:$0xff] %v351
        %390 = vst [vmem:[#allocation3 + $0x8] sm:$0xff] %v352
        %v391 = vld [vmem:[#allocation2] sm:$0xff]
        %v392 = vld [vmem:[#allocation2 + $0x8] sm:$0xff]
        %v394 = vlaneseq
        %v395 = vshrl.u32 %v394, 7
        %v396 = vsub.s32 0, %v395
        %v397 = vrot.slane %v386, %v396
        %v398 = vlaneseq
        %v399 = vshrl.u32 %v398, 7
        %v400 = vsub.s32 1, %v399
        %v401 = vrot.slane %v386, %v400
        %v404 = vmul.f32 %v391, %v397
        %v405 = vmul.f32 %v392, %v401
        %406 = vst [vmem:[#allocation3 + $0x10] sm:$0xff] %v404
        %407 = vst [vmem:[#allocation3 + $0x18] sm:$0xff] %v405
        %v408 = vld [vmem:[#allocation2] sm:$0xff]
        %v409 = vld [vmem:[#allocation2 + $0x8] sm:$0xff]
        %v410 = vld [vmem:[#allocation2 + $0x10] sm:$0xff]
        %v412 = vlaneseq
        %v413 = vshrl.u32 %v412, 7
        %v414 = vsub.s32 0, %v413
        %v415 = vrot.slane %v388, %v414
        %v416 = vlaneseq
        %v417 = vshrl.u32 %v416, 7
        %v418 = vsub.s32 1, %v417
        %v419 = vrot.slane %v388, %v418
        %420 = vrot.lane.b32.xlu0 %v415, 2
        %v421 = vpop.permute.xlu0 %420
        %422 = vrot.lane.b32.xlu0 %v419, 2
        %v423 = vpop.permute.xlu0 %422
        %vm424 = vcmask 15360
        %v425 = vsel %vm424, %v421, %v423
        %v429 = vmul.f32 %v408, %v421
        %v430 = vmul.f32 %v409, %v425
        %v431 = vmul.f32 %v410, %v423
        %435 = vrot.lane.b32.xlu0 %v429, 126
        %v436 = vpop.permute.xlu0 %435
        %437 = vrot.lane.b32.xlu0 %v430, 126
        %v438 = vpop.permute.xlu0 %437
        %439 = vrot.lane.b32.xlu0 %v431, 126
        %v440 = vpop.permute.xlu0 %439
        %vm441 = vcmask 1031168
        %v442 = vsel %vm441, %v436, %v438
        %v443 = vsel %vm441, %v438, %v440
        %446 = vst [vmem:[#allocation3 + $0x20] sm:$0xff] %v442
        %447 = vst [vmem:[#allocation3 + $0x28] sm:$0xff] %v443
        %v448 = vld [vmem:[#allocation2] sm:$0xff]
        %v449 = vld [vmem:[#allocation2 + $0x8] sm:$0xff]
        %v450 = vld [vmem:[#allocation2 + $0x10] sm:$0xff]
        %451 = vrot.lane.b32.xlu0 %v397, 32
        %v452 = vpop.permute.xlu0 %451
        %453 = vrot.lane.b32.xlu0 %v401, 32
        %v454 = vpop.permute.xlu0 %453
        %vm455 = vcmask 261120
        %v456 = vsel %vm455, %v452, %v454
        %v460 = vmul.f32 %v448, %v452
        %v461 = vmul.f32 %v449, %v456
        %v462 = vmul.f32 %v450, %v454
        %466 = vrot.lane.b32.xlu0 %v460, 96
        %v467 = vpop.permute.xlu0 %466
        %468 = vrot.lane.b32.xlu0 %v461, 96
        %v469 = vpop.permute.xlu0 %468
        %470 = vrot.lane.b32.xlu0 %v462, 96
        %v471 = vpop.permute.xlu0 %470
        %vm472 = vcmask 785408
        %v473 = vsel %vm472, %v467, %v469
        %v474 = vsel %vm472, %v469, %v471
        %477 = vst [vmem:[#allocation3 + $0x30] sm:$0xff] %v473
        %478 = vst [vmem:[#allocation3 + $0x38] sm:$0xff] %v474
        %v479 = vld [vmem:[#allocation2] sm:$0xff]
        %v480 = vld [vmem:[#allocation2 + $0x8] sm:$0xff]
        %v481 = vld [vmem:[#allocation2 + $0x10] sm:$0xff]
        %482 = vrot.lane.b32.xlu0 %v415, 34
        %v483 = vpop.permute.xlu0 %482
        %484 = vrot.lane.b32.xlu0 %v419, 34
        %v485 = vpop.permute.xlu0 %484
        %vm486 = vcmask 277504
        %v487 = vsel %vm486, %v483, %v485
        %v491 = vmul.f32 %v479, %v483
        %v492 = vmul.f32 %v480, %v487
        %v493 = vmul.f32 %v481, %v485
        %497 = vrot.lane.b32.xlu0 %v491, 94
        %v498 = vpop.permute.xlu0 %497
        %499 = vrot.lane.b32.xlu0 %v492, 94
        %v500 = vpop.permute.xlu0 %499
        %501 = vrot.lane.b32.xlu0 %v493, 94
        %v502 = vpop.permute.xlu0 %501
        %vm503 = vcmask 769024
        %v504 = vsel %vm503, %v498, %v500
        %v505 = vsel %vm503, %v500, %v502
        %508 = vst [vmem:[#allocation3 + $0x40] sm:$0xff] %v504
        %509 = vst [vmem:[#allocation3 + $0x48] sm:$0xff] %v505
        %v510 = vld [vmem:[#allocation10] sm:$0xff]
        %v511 = vld [vmem:[#allocation3] sm:$0xff]
        %v512 = vld [vmem:[#allocation3 + $0x8] sm:$0xff]
        %v513 = vld [vmem:[#allocation3 + $0x10] sm:$0xff]
        %v514 = vld [vmem:[#allocation3 + $0x18] sm:$0xff]
        %v515 = vld [vmem:[#allocation3 + $0x20] sm:$0xff]
        %v516 = vld [vmem:[#allocation3 + $0x28] sm:$0xff]
        %v517 = vld [vmem:[#allocation3 + $0x30] sm:$0xff]
        %v518 = vld [vmem:[#allocation3 + $0x38] sm:$0xff]
        %v519 = vld [vmem:[#allocation3 + $0x40] sm:$0xff]
        %v520 = vld [vmem:[#allocation3 + $0x48] sm:$0xff]
        %vm521 = vcmask 326656
        %v523 = vsel %vm521, %v510, 0
        %525 = vmatprep.subr.mxu0 0.0
        %526 = vmatpush1.msra.mxu0 0.0
        %527 = vmatprep.subr.mxu0 0.0
        %528 = vmatpush1.msra.mxu0 0.0
        %529 = vmatprep.subr.mxu0 0.0
        %530 = vmatpush1.msra.mxu0 0.0
        %531 = vmatprep.subr.mxu0 0.0
        %532 = vmatpush1.msra.mxu0 0.0
        %533 = vmatprep.subr.mxu0 0.0
        %534 = vmatpush1.msra.mxu0 0.0
        %535 = vmatprep.subr.mxu0 0.0
        %536 = vmatpush1.msra.mxu0 0.0
        %537 = vmatprep.subr.mxu0 0.0
        %538 = vmatpush1.msra.mxu0 0.0
        %539 = vmatprep.subr.mxu0 0.0
        %540 = vmatpush1.msra.mxu0 0.0
        %541 = vmatprep.subr.mxu0 0.0
        %542 = vmatpush1.msra.mxu0 0.0
        %543 = vmatprep.subr.mxu0 0.0
        %544 = vmatpush1.msra.mxu0 0.0
        %545 = vmatprep.subr.mxu0 0.0
        %546 = vmatpush1.msra.mxu0 0.0
        %547 = vmatprep.subr.mxu0 %v520
        %548 = vmatpush1.msra.mxu0 %v519
        %549 = vmatprep.subr.mxu0 %v518
        %550 = vmatpush1.msra.mxu0 %v517
        %551 = vmatprep.subr.mxu0 %v516
        %552 = vmatpush1.msra.mxu0 %v515
        %553 = vmatprep.subr.mxu0 %v514
        %554 = vmatpush1.msra.mxu0 %v513
        %555 = vmatprep.subr.mxu0 %v512
        %556 = vmatpush1.msra.mxu0 %v511
        %557 = vmatprep.subr.mxu0 0.0
        %558 = vmatpush2.msra.mxu0 0.0
        %559 = vmatprep.subr.mxu0 0.0
        %560 = vmatpush2.msra.mxu0 0.0
        %561 = vmatprep.subr.mxu0 0.0
        %562 = vmatpush2.msra.mxu0 0.0
        %563 = vmatprep.subr.mxu0 0.0
        %564 = vmatpush2.msra.mxu0 0.0
        %565 = vmatprep.subr.mxu0 0.0
        %566 = vmatpush2.msra.mxu0 0.0
        %567 = vmatprep.subr.mxu0 0.0
        %568 = vmatpush2.msra.mxu0 0.0
        %569 = vmatprep.subr.mxu0 0.0
        %570 = vmatpush2.msra.mxu0 0.0
        %571 = vmatprep.subr.mxu0 0.0
        %572 = vmatpush2.msra.mxu0 0.0
        %573 = vmatprep.subr.mxu0 0.0
        %574 = vmatpush2.msra.mxu0 0.0
        %575 = vmatprep.subr.mxu0 0.0
        %576 = vmatpush2.msra.mxu0 0.0
        %577 = vmatprep.subr.mxu0 0.0
        %578 = vmatpush2.msra.mxu0 0.0
        %579 = vmatprep.subr.mxu0 0.0
        %580 = vmatpush2.msra.mxu0 0.0
        %581 = vmatprep.subr.mxu0 0.0
        %582 = vmatpush2.msra.mxu0 0.0
        %583 = vmatprep.subr.mxu0 0.0
        %584 = vmatpush2.msra.mxu0 0.0
        %585 = vmatprep.subr.mxu0 0.0
        %586 = vmatpush2.msra.mxu0 0.0
        %587 = vmatprep.subr.mxu0 0.0
        %588 = vmatpush2.msra.mxu0 0.0
        %589 = vmatprep.mubr.f32.mxu0 0.0
        %590 = vmatmul.mubr.f32.gmra.mxu0 %v523
        %v591 = vpop.f32.mrf.mxu0
        %v592 = vadd.f32 0.0, %v591
        %v593 = vpop.f32.mrf.mxu0
        %v594 = vadd.f32 0.0, %v593
        %595 = vdwg.mxu0
        %596 = vst [vmem:[%s348] sm:$0xff] %v592
        %597 = vst [vmem:[%s348 + $0x8] sm:$0xff] %v594
        %s598 = sand.u32 %s174, 1
        %s599 = scalar_lea.sflag [#allocation6], %s598
        %s600 = sand.u32 %s174, 1
        %s601 = smul.addr %s600, 16
        %s602 = scalar_lea.vmem [#allocation12], %s601
        // Predicated region
        $region57: #{tpu_custom_call.1} parent=39 // pred_check
          %p603 = pneg %p184
        $region58: #{tpu_custom_call.1} parent=39 // pred_check_branch
          %605 = sbr.rel (%p603) target = $region60
        $region59: #{tpu_custom_call.1} parent=39 // pred_region
          %s606 = smul.u32 2, %s31
          %s608 = ssub.s32 256, 256
          %609 = vsyncadd %s599, %s608
          %s610 = smul.addr %s30, 2
          %s611 = sadd.s32 %s606, %s610
          %s612 = smul.addr %s611, 128
          %s613 = scalar_lea.hbm %s5, %s612
          %s615 = sshll.u32 %s602, 4
          %s616 = int_to_ptr.vmem [resolvable:$true] %s615
          %618 = dma.vmem_to_hbm [thread:$0]  %s616, 256, %s613, %s599
        $region60: #{tpu_custom_call.1} parent=39 // pred_fallthru
          _
      $region40: #{tpu_custom_call.1} parent=5 // pred_fallthru
        _
      %p619 = scmp.le.s32.totalorder 2, %s21
      // Predicated region
      $region61: #{tpu_custom_call.1} parent=5 // pred_check
        %p620 = pneg %p619
      $region62: #{tpu_custom_call.1} parent=5 // pred_check_branch
        %622 = sbr.rel (%p620) target = $region64
      $region63: #{tpu_custom_call.1} parent=5 // pred_region
        %s623 = ssub.s32 %s21, 2
        // Predicated region
        $region65: #{tpu_custom_call.1} parent=63 // pred_check
          %p624 = pneg %p190
        $region66: #{tpu_custom_call.1} parent=63 // pred_check_branch
          %626 = sbr.rel (%p624) target = $region68
        $region67: #{tpu_custom_call.1} parent=63 // pred_region
          %s627 = sand.u32 %s175, 1
          %s628 = scalar_lea.sflag [#allocation6], %s627
          %s629 = sand.u32 %s175, 1
          %s630 = smul.addr %s629, 16
          %s631 = scalar_lea.vmem [#allocation12], %s630
          %632 = dma.done %s628, 256
        $region68: #{tpu_custom_call.1} parent=63 // pred_fallthru
          _
      $region64: #{tpu_custom_call.1} parent=5 // pred_fallthru
        _
    $region6: #{tpu_custom_call.1} parent=1 // loop_footer
      %s25 = sadd.s32 1, %s21
    $region7: #{tpu_custom_call.1} parent=1 // loop_footer_branch
      %20 = sbr.rel target = $region3
    $region8: #{tpu_custom_call.1} parent=1 // loop_exit
      _
    %633 = vsyncpa [#allocation5], 1
    %s634 = scalar_lea.sflag [#allocation5], 1
    %635 = vsyncpa %s634, 1
    %636 = vsyncpa [#allocation8], 1
    %s637 = scalar_lea.sflag [#allocation8], 1
    %638 = vsyncpa %s637, 1
    %639 = vsyncpa [#allocation11], 1
    %640 = vsyncpa [#allocation6], 1
    %s641 = scalar_lea.sflag [#allocation6], 1
    %642 = vsyncpa %s641, 1

</llo_original>
